<compile_context>
chip_gen: v6e
topology: v6e:2x2x1
jax: 0.10.0
libtpu: 0.0.40
codegen_flags: <defaults>
</compile_context>

<pallas_src>
import jax
import jax.numpy as jnp
from jax.experimental import pallas as pl
from jax.experimental.pallas import tpu as pltpu

_LANE = 128
_SUBLANE = 8


def _round_up(n, m):
    return ((n + m - 1) // m) * m


# ----------------------------- Pallas kernel -----------------------------

def _aux_classifier_kernel(x_ref, w1_ref, b1_ref, w2_ref, b2_ref, o_ref):
    """Fused forward: out = relu(x @ W1 + b1) @ W2 + b2, hidden kept in VMEM/vregs."""
    x = x_ref[...]                                                      # (TB, Din)
    h = jnp.dot(x, w1_ref[...], preferred_element_type=jnp.float32)    # MXU, f32 acc
    h = jnp.maximum(h + b1_ref[...], 0.0)                              # bias + ReLU (VPU)
    out = jnp.dot(h.astype(w2_ref.dtype), w2_ref[...],
                  preferred_element_type=jnp.float32) + b2_ref[...]    # (TB, Cp)
    o_ref[...] = out.astype(o_ref.dtype)                               # lane-dense store


# ----------------------------- Wrapper -----------------------------

def aux_classifier_forward(x, w1, b1, w2, b2, *, tb=None, use_bf16=False,
                           vmem_budget_bytes=8 * 1024 * 1024):
    """One pallas_call for the whole network; grid over the batch axis only."""
    B, Din = x.shape
    H = w1.shape[1]
    C = w2.shape[1]

    # ---- Lane-dense output: pad class dim to a multiple of 128 with zero columns.
    Cp = _round_up(max(C, _LANE), _LANE)
    if Cp != C:
        w2 = jnp.pad(w2, ((0, 0), (0, Cp - C)))
        b2 = jnp.pad(b2, ((0, 0), (0, Cp - C)))

    # ---- Optional bf16 MXU inputs (f32 accumulation stays inside the kernel).
    if use_bf16:
        x = x.astype(jnp.bfloat16)
        w1 = w1.astype(jnp.bfloat16)
        w2 = w2.astype(jnp.bfloat16)

    in_itemsize = jnp.dtype(x.dtype).itemsize

    # ---- Batch tile from a VMEM budget (x tile + out tile, both double-buffered).
    per_row_bytes = 2 * (Din * in_itemsize + Cp * 4)
    if tb is None:
        tb = (vmem_budget_bytes // per_row_bytes) // _SUBLANE * _SUBLANE
        tb = int(max(_SUBLANE, min(tb, 8192)))
        tb = min(tb, _round_up(B, _SUBLANE))            # never bigger than the batch
        # v7x megacore: keep >= 2 grid steps for large batches so the "parallel" batch
        # axis can shard across the two TensorCores (no-op on single-TC v5e/v6e).
        if B >= 1024 and pl.cdiv(B, tb) < 2:
            tb = max(_SUBLANE, _round_up(pl.cdiv(B, 2), _SUBLANE))
    tb = int(tb)

    # ---- cdiv grid + zero-padded batch (no divisibility requirement on B).
    n_tiles = int(pl.cdiv(B, tb))
    Bp = n_tiles * tb
    if Bp != B:
        x = jnp.pad(x, ((0, Bp - B), (0, 0)))

    # ---- Constant-index operands: single-buffered (block index never changes).
    def _resident_spec(block_shape):
        try:
            return pl.BlockSpec(block_shape, lambda i: (0, 0),
                                pipeline_mode=pl.Buffered(1))
        except TypeError:  # older signature without pipeline_mode
            return pl.BlockSpec(block_shape, lambda i: (0, 0))

    # ---- Explicit VMEM bound + cost estimate.
    w_bytes = int(w1.size * jnp.dtype(w1.dtype).itemsize
                  + w2.size * jnp.dtype(w2.dtype).itemsize
                  + b1.size * jnp.dtype(b1.dtype).itemsize
                  + b2.size * jnp.dtype(b2.dtype).itemsize)
    tile_bytes = 2 * tb * (Din * in_itemsize + Cp * 4)
    vmem_limit = int(min(max(2 * (w_bytes + tile_bytes), 16 * 1024 * 1024),
                         48 * 1024 * 1024))
    cost = pl.CostEstimate(
        flops=2 * Bp * Din * H + 2 * Bp * H * Cp,
        transcendentals=0,
        bytes_accessed=int(Bp * Din * in_itemsize + w_bytes + Bp * Cp * 4),
    )

    out = pl.pallas_call(
        _aux_classifier_kernel,
        out_shape=jax.ShapeDtypeStruct((Bp, Cp), jnp.float32),
        grid_spec=pltpu.PrefetchScalarGridSpec(
            num_scalar_prefetch=0,
            grid=(n_tiles,),
            in_specs=[
                pl.BlockSpec((tb, Din), lambda i: (i, 0)),   # batch tile of activations
                _resident_spec((Din, H)),                    # W1 (resident, single-buffered)
                _resident_spec((1, H)),                      # b1
                _resident_spec((H, Cp)),                     # W2 (padded cols, resident)
                _resident_spec((1, Cp)),                     # b2 (padded cols)
            ],
            out_specs=pl.BlockSpec((tb, Cp), lambda i: (i, 0)),
        ),
        compiler_params=pltpu.CompilerParams(
            dimension_semantics=("parallel",),   # batch tiles independent -> megacore on v7x
            vmem_limit_bytes=vmem_limit,
        ),
        cost_estimate=cost,
    )(x, w1, b1, w2, b2)

    return out[:B, :C]


# ----------------------------- Parameters -----------------------------

def init_aux_classifier_params(key, input_dim, hidden_dim, nb_classes):
    """Mirrors AuxClassifier.__init__ + init_weights_normal: W ~ N(0, 0.001), b = 0.

    Weights stored as (in, out) so the kernel does x @ W + b (== PyTorch x W^T + b).
    """
    k1, k2 = jax.random.split(key)
    w1 = jax.random.normal(k1, (input_dim, hidden_dim), dtype=jnp.float32) * 0.001
    b1 = jnp.zeros((1, hidden_dim), dtype=jnp.float32)
    w2 = jax.random.normal(k2, (hidden_dim, nb_classes), dtype=jnp.float32) * 0.001
    b2 = jnp.zeros((1, nb_classes), dtype=jnp.float32)
    return {"w1": w1, "b1": b1, "w2": w2, "b2": b2}


@jax.jit
def aux_classifier(x, params):
    return aux_classifier_forward(x, params["w1"], params["b1"],
                                  params["w2"], params["b2"])


# ----------------------------- Reference (plain JAX) -----------------------------

def _reference_forward(x, params):
    h = jnp.maximum(x @ params["w1"] + params["b1"], 0.0)
    return h @ params["w2"] + params["b2"]


# ----------------------------- Main -----------------------------

if __name__ == "__main__":
    input_dim, hidden_dim, nb_classes = 16, 32, 8
    batch = 8

    key = jax.random.PRNGKey(0)
    pkey, xkey = jax.random.split(key)
    params = init_aux_classifier_params(pkey, input_dim, hidden_dim, nb_classes)
    x = jax.random.normal(xkey, (batch, input_dim), dtype=jnp.float32)

    out = jax.block_until_ready(aux_classifier(x, params))
    ref = _reference_forward(x, params)

    assert out.shape == (batch, nb_classes), out.shape
    assert jnp.allclose(out, ref, atol=1e-5, rtol=1e-5), "mismatch vs reference"

    print("KERNEL_OK")
</pallas_src>

<mosaic_0001>
module attributes {stable_mosaic.version = 11 : i64} {
  func.func @_aux_classifier_kernel(%arg0: i32, %arg1: memref<8x16xf32, #tpu.memory_space<vmem>>, %arg2: memref<16x32xf32, #tpu.memory_space<vmem>>, %arg3: memref<1x32xf32, #tpu.memory_space<vmem>>, %arg4: memref<32x128xf32, #tpu.memory_space<vmem>>, %arg5: memref<1x128xf32, #tpu.memory_space<vmem>>, %arg6: memref<8x128xf32, #tpu.memory_space<vmem>>) attributes {dimension_semantics = [#tpu.dimension_semantics<parallel>], iteration_bounds = array<i64: 1>, scalar_prefetch = 0 : i64, scratch_operands = 0 : i64, tpu.core_type = #tpu.core_type<tc>, window_params = [{transform_indices = @transform_0, window_bounds = array<i64: 8, 16>}, {pipeline_mode = #tpu.pipeline_mode<synchronous>, transform_indices = @transform_1, window_bounds = array<i64: 16, 32>}, {pipeline_mode = #tpu.pipeline_mode<synchronous>, transform_indices = @transform_2, window_bounds = array<i64: 1, 32>}, {pipeline_mode = #tpu.pipeline_mode<synchronous>, transform_indices = @transform_3, window_bounds = array<i64: 32, 128>}, {pipeline_mode = #tpu.pipeline_mode<synchronous>, transform_indices = @transform_4, window_bounds = array<i64: 1, 128>}, {transform_indices = @transform_5, window_bounds = array<i64: 8, 128>}]} {
    %c0 = arith.constant 0 : index
    %c0_0 = arith.constant 0 : index
    %0 = vector.load %arg1[%c0, %c0_0] : memref<8x16xf32, #tpu.memory_space<vmem>>, vector<8x16xf32>
    %c0_1 = arith.constant 0 : index
    %c0_2 = arith.constant 0 : index
    %1 = vector.load %arg2[%c0_1, %c0_2] : memref<16x32xf32, #tpu.memory_space<vmem>>, vector<16x32xf32>
    %cst = arith.constant dense<0.000000e+00> : vector<8x32xf32>
    %2 = tpu.matmul %0, %1, %cst {dimension_numbers = #tpu.dot_dimension_numbers<[1], [0], [0], [1], [0, 0, 1, 1], [], []>} : vector<8x16xf32>, vector<16x32xf32>, vector<8x32xf32> -> vector<8x32xf32>
    %c0_3 = arith.constant 0 : index
    %c0_4 = arith.constant 0 : index
    %3 = vector.load %arg3[%c0_3, %c0_4] : memref<1x32xf32, #tpu.memory_space<vmem>>, vector<1x32xf32>
    %4 = vector.broadcast %3 : vector<1x32xf32> to vector<8x32xf32>
    %5 = arith.addf %2, %4 : vector<8x32xf32>
    %cst_5 = arith.constant 0.000000e+00 : f32
    %6 = vector.broadcast %cst_5 : f32 to vector<8x32xf32>
    %7 = arith.maximumf %5, %6 : vector<8x32xf32>
    %c0_6 = arith.constant 0 : index
    %c0_7 = arith.constant 0 : index
    %8 = vector.load %arg4[%c0_6, %c0_7] : memref<32x128xf32, #tpu.memory_space<vmem>>, vector<32x128xf32>
    %cst_8 = arith.constant dense<0.000000e+00> : vector<8x128xf32>
    %9 = tpu.matmul %7, %8, %cst_8 {dimension_numbers = #tpu.dot_dimension_numbers<[1], [0], [0], [1], [0, 0, 1, 1], [], []>} : vector<8x32xf32>, vector<32x128xf32>, vector<8x128xf32> -> vector<8x128xf32>
    %c0_9 = arith.constant 0 : index
    %c0_10 = arith.constant 0 : index
    %10 = vector.load %arg5[%c0_9, %c0_10] : memref<1x128xf32, #tpu.memory_space<vmem>>, vector<1x128xf32>
    %11 = vector.broadcast %10 : vector<1x128xf32> to vector<8x128xf32>
    %12 = arith.addf %9, %11 : vector<8x128xf32>
    %c0_11 = arith.constant 0 : index
    %c0_12 = arith.constant 0 : index
    %13 = vector.load %arg6[%c0_11, %c0_12] : memref<8x128xf32, #tpu.memory_space<vmem>>, vector<8x128xf32>
    tpu.vector_store %arg6[%c0_11, %c0_12], %12 {strides = array<i32>} : memref<8x128xf32, #tpu.memory_space<vmem>>, vector<8x128xf32>,
    return
  }
  func.func @transform_0(%arg0: i32) -> (i32, i32) {
    %c0_i32 = arith.constant 0 : i32
    %c0_i32_0 = arith.constant 0 : i32
    return %arg0, %c0_i32 : i32, i32
  }
  func.func @transform_1(%arg0: i32) -> (i32, i32) {
    %c0_i32 = arith.constant 0 : i32
    %c0_i32_0 = arith.constant 0 : i32
    %c0_i32_1 = arith.constant 0 : i32
    return %c0_i32, %c0_i32_0 : i32, i32
  }
  func.func @transform_2(%arg0: i32) -> (i32, i32) {
    %c0_i32 = arith.constant 0 : i32
    %c0_i32_0 = arith.constant 0 : i32
    %c0_i32_1 = arith.constant 0 : i32
    return %c0_i32, %c0_i32_0 : i32, i32
  }
  func.func @transform_3(%arg0: i32) -> (i32, i32) {
    %c0_i32 = arith.constant 0 : i32
    %c0_i32_0 = arith.constant 0 : i32
    %c0_i32_1 = arith.constant 0 : i32
    return %c0_i32, %c0_i32_0 : i32, i32
  }
  func.func @transform_4(%arg0: i32) -> (i32, i32) {
    %c0_i32 = arith.constant 0 : i32
    %c0_i32_0 = arith.constant 0 : i32
    %c0_i32_1 = arith.constant 0 : i32
    return %c0_i32, %c0_i32_0 : i32, i32
  }
  func.func @transform_5(%arg0: i32) -> (i32, i32) {
    %c0_i32 = arith.constant 0 : i32
    %c0_i32_0 = arith.constant 0 : i32
    return %arg0, %c0_i32 : i32, i32
  }
}

</mosaic_0001>

<llo_original>
// kernel: aux_classifier.1
$region0: #{aux_classifier.1}
  #allocation0 [shape = 'u32[]', space=smem, size = 0x4, offset = 0x4, fixed_abs, tag = 'smem constant byte address 0x4 - core index']
  #allocation1 [shape = 'u32[144,128]{1,0:T(1,128)}', space=vmem, size = 0x12000, scoped, tag = 'internal scratch']
  %s0 = inlined_call_operand.vmem [shape: f32[8,16], index: 0, kind: input, shape index: {}]
  %s1 = inlined_call_operand.vmem [shape: f32[16,32], index: 1, kind: input, shape index: {}]
  %s2 = inlined_call_operand.vmem [shape: f32[1,32], index: 2, kind: input, shape index: {}]
  %s3 = inlined_call_operand.vmem [shape: f32[32,128], index: 3, kind: input, shape index: {}]
  %s4 = inlined_call_operand.vmem [shape: f32[1,128], index: 4, kind: input, shape index: {}]
  %s5 = inlined_call_operand.hbm [shape: f32[8,128], index: 5, kind: output, shape index: {}]
  %s6 = sld [smem:[#allocation0]]
  $region30: #{aux_classifier.1} parent=0
    _
  %s8 = ssub.s32 1, %s6
  %s9 = scalar_select 0, %s8, %s6
  $region1: #{aux_classifier.1} parent=0
    #allocation2 [shape = 'u8[4096]{0}', space=vmem, size = 0x1000, scoped, tag = 'output window, operand 0, single buffered']
    #allocation3 [shape = 's32[1]{0}', space=sflag, size = 0x4, scoped, tag = 'scoped memory for aux_classifier.1']
    %10 = vsyncpa [#allocation3], 0
    // Predicated region
    $region2: #{aux_classifier.1} parent=1 // pred_check
      _
    $region3: #{aux_classifier.1} parent=1 // pred_check_branch
      %12 = sbr.rel (0) target = $region5
    $region4: #{aux_classifier.1} parent=1 // pred_region
      _
    $region5: #{aux_classifier.1} parent=1 // pred_fallthru
      _
    // Predicated region
    $region6: #{aux_classifier.1} parent=1 // pred_check
      _
    $region7: #{aux_classifier.1} parent=1 // pred_check_branch
      %14 = sbr.rel (0) target = $region9
    $region8: #{aux_classifier.1} parent=1 // pred_region
      _
    $region9: #{aux_classifier.1} parent=1 // pred_fallthru
      _
    // Predicated region
    $region10: #{aux_classifier.1} parent=1 // pred_check
      _
    $region11: #{aux_classifier.1} parent=1 // pred_check_branch
      %16 = sbr.rel (0) target = $region13
    $region12: #{aux_classifier.1} parent=1 // pred_region
      _
    $region13: #{aux_classifier.1} parent=1 // pred_fallthru
      _
    // Predicated region
    $region14: #{aux_classifier.1} parent=1 // pred_check
      _
    $region15: #{aux_classifier.1} parent=1 // pred_check_branch
      %18 = sbr.rel (0) target = $region17
    $region16: #{aux_classifier.1} parent=1 // pred_region
      _
    $region17: #{aux_classifier.1} parent=1 // pred_fallthru
      _
    // Predicated region
    $region18: #{aux_classifier.1} parent=1 // pred_check
      _
    $region19: #{aux_classifier.1} parent=1 // pred_check_branch
      %20 = sbr.rel (0) target = $region21
    $region20: #{aux_classifier.1} parent=1 // pred_region
      _
    $region21: #{aux_classifier.1} parent=1 // pred_fallthru
      _
    %v21 = vld [vmem:[%s0] sm:$0xff]
    %v22 = vld [vmem:[%s1] sm:$0xff]
    %v23 = vld [vmem:[%s1 + $0x8] sm:$0xff]
    %v24 = vld [vmem:[%s2] sm:$0x1]
    %v26 = vlaneseq
    %v27 = vshrl.u32 %v26, 7
    %v28 = vsub.s32 0, %v27
    %v29 = vrot.slane %v24, %v28
    %vm31 = vcmask 130048
    %v33 = vsel %vm31, %v21, 0
    %35 = vmatprep.subr.mxu0 0.0
    %36 = vmatpush1.msra.mxu0 0.0
    %37 = vmatprep.subr.mxu0 0.0
    %38 = vmatpush1.msra.mxu0 0.0
    %39 = vmatprep.subr.mxu0 0.0
    %40 = vmatpush1.msra.mxu0 0.0
    %41 = vmatprep.subr.mxu0 0.0
    %42 = vmatpush1.msra.mxu0 0.0
    %43 = vmatprep.subr.mxu0 0.0
    %44 = vmatpush1.msra.mxu0 0.0
    %45 = vmatprep.subr.mxu0 0.0
    %46 = vmatpush1.msra.mxu0 0.0
    %47 = vmatprep.subr.mxu0 0.0
    %48 = vmatpush1.msra.mxu0 0.0
    %49 = vmatprep.subr.mxu0 0.0
    %50 = vmatpush1.msra.mxu0 0.0
    %51 = vmatprep.subr.mxu0 0.0
    %52 = vmatpush1.msra.mxu0 0.0
    %53 = vmatprep.subr.mxu0 0.0
    %54 = vmatpush1.msra.mxu0 0.0
    %55 = vmatprep.subr.mxu0 0.0
    %56 = vmatpush1.msra.mxu0 0.0
    %57 = vmatprep.subr.mxu0 0.0
    %58 = vmatpush1.msra.mxu0 0.0
    %59 = vmatprep.subr.mxu0 0.0
    %60 = vmatpush1.msra.mxu0 0.0
    %61 = vmatprep.subr.mxu0 0.0
    %62 = vmatpush1.msra.mxu0 0.0
    %63 = vmatprep.subr.mxu0 0.0
    %64 = vmatpush1.msra.mxu0 %v23
    %65 = vmatprep.subr.mxu0 0.0
    %66 = vmatpush1.msra.mxu0 %v22
    %67 = vmatprep.subr.mxu0 0.0
    %68 = vmatpush2.msra.mxu0 0.0
    %69 = vmatprep.subr.mxu0 0.0
    %70 = vmatpush2.msra.mxu0 0.0
    %71 = vmatprep.subr.mxu0 0.0
    %72 = vmatpush2.msra.mxu0 0.0
    %73 = vmatprep.subr.mxu0 0.0
    %74 = vmatpush2.msra.mxu0 0.0
    %75 = vmatprep.subr.mxu0 0.0
    %76 = vmatpush2.msra.mxu0 0.0
    %77 = vmatprep.subr.mxu0 0.0
    %78 = vmatpush2.msra.mxu0 0.0
    %79 = vmatprep.subr.mxu0 0.0
    %80 = vmatpush2.msra.mxu0 0.0
    %81 = vmatprep.subr.mxu0 0.0
    %82 = vmatpush2.msra.mxu0 0.0
    %83 = vmatprep.subr.mxu0 0.0
    %84 = vmatpush2.msra.mxu0 0.0
    %85 = vmatprep.subr.mxu0 0.0
    %86 = vmatpush2.msra.mxu0 0.0
    %87 = vmatprep.subr.mxu0 0.0
    %88 = vmatpush2.msra.mxu0 0.0
    %89 = vmatprep.subr.mxu0 0.0
    %90 = vmatpush2.msra.mxu0 0.0
    %91 = vmatprep.subr.mxu0 0.0
    %92 = vmatpush2.msra.mxu0 0.0
    %93 = vmatprep.subr.mxu0 0.0
    %94 = vmatpush2.msra.mxu0 0.0
    %95 = vmatprep.subr.mxu0 0.0
    %96 = vmatpush2.msra.mxu0 0.0
    %97 = vmatprep.subr.mxu0 0.0
    %98 = vmatpush2.msra.mxu0 0.0
    %99 = vmatprep.mubr.f32.mxu0 0.0
    %100 = vmatmul.mubr.f32.gmra.mxu0 %v33
    %v101 = vpop.f32.mrf.mxu0
    %v102 = vadd.f32 %v29, %v101
    %v103 = vpop.f32.mrf.mxu0
    %104 = vdwg.mxu0
    %v105 = vmax.f32 %v102, 0.0
    %v106 = vld [vmem:[%s3] sm:$0xff]
    %v107 = vld [vmem:[%s3 + $0x8] sm:$0xff]
    %v108 = vld [vmem:[%s3 + $0x10] sm:$0xff]
    %v109 = vld [vmem:[%s3 + $0x18] sm:$0xff]
    %v110 = vld [vmem:[%s4] sm:$0x1]
    %v112 = vlaneseq
    %v113 = vshrl.u32 %v112, 7
    %v114 = vsub.s32 0, %v113
    %v115 = vrot.slane %v110, %v114
    %vm117 = vcmask 261120
    %v119 = vsel %vm117, %v105, 0
    %121 = vmatprep.subr.mxu0 0.0
    %122 = vmatpush1.msra.mxu0 0.0
    %123 = vmatprep.subr.mxu0 0.0
    %124 = vmatpush1.msra.mxu0 0.0
    %125 = vmatprep.subr.mxu0 0.0
    %126 = vmatpush1.msra.mxu0 0.0
    %127 = vmatprep.subr.mxu0 0.0
    %128 = vmatpush1.msra.mxu0 0.0
    %129 = vmatprep.subr.mxu0 0.0
    %130 = vmatpush1.msra.mxu0 0.0
    %131 = vmatprep.subr.mxu0 0.0
    %132 = vmatpush1.msra.mxu0 0.0
    %133 = vmatprep.subr.mxu0 0.0
    %134 = vmatpush1.msra.mxu0 0.0
    %135 = vmatprep.subr.mxu0 0.0
    %136 = vmatpush1.msra.mxu0 0.0
    %137 = vmatprep.subr.mxu0 0.0
    %138 = vmatpush1.msra.mxu0 0.0
    %139 = vmatprep.subr.mxu0 0.0
    %140 = vmatpush1.msra.mxu0 0.0
    %141 = vmatprep.subr.mxu0 0.0
    %142 = vmatpush1.msra.mxu0 0.0
    %143 = vmatprep.subr.mxu0 0.0
    %144 = vmatpush1.msra.mxu0 0.0
    %145 = vmatprep.subr.mxu0 0.0
    %146 = vmatpush1.msra.mxu0 %v109
    %147 = vmatprep.subr.mxu0 0.0
    %148 = vmatpush1.msra.mxu0 %v108
    %149 = vmatprep.subr.mxu0 0.0
    %150 = vmatpush1.msra.mxu0 %v107
    %151 = vmatprep.subr.mxu0 0.0
    %152 = vmatpush1.msra.mxu0 %v106
    %153 = vmatprep.subr.mxu0 0.0
    %154 = vmatpush2.msra.mxu0 0.0
    %155 = vmatprep.subr.mxu0 0.0
    %156 = vmatpush2.msra.mxu0 0.0
    %157 = vmatprep.subr.mxu0 0.0
    %158 = vmatpush2.msra.mxu0 0.0
    %159 = vmatprep.subr.mxu0 0.0
    %160 = vmatpush2.msra.mxu0 0.0
    %161 = vmatprep.subr.mxu0 0.0
    %162 = vmatpush2.msra.mxu0 0.0
    %163 = vmatprep.subr.mxu0 0.0
    %164 = vmatpush2.msra.mxu0 0.0
    %165 = vmatprep.subr.mxu0 0.0
    %166 = vmatpush2.msra.mxu0 0.0
    %167 = vmatprep.subr.mxu0 0.0
    %168 = vmatpush2.msra.mxu0 0.0
    %169 = vmatprep.subr.mxu0 0.0
    %170 = vmatpush2.msra.mxu0 0.0
    %171 = vmatprep.subr.mxu0 0.0
    %172 = vmatpush2.msra.mxu0 0.0
    %173 = vmatprep.subr.mxu0 0.0
    %174 = vmatpush2.msra.mxu0 0.0
    %175 = vmatprep.subr.mxu0 0.0
    %176 = vmatpush2.msra.mxu0 0.0
    %177 = vmatprep.subr.mxu0 0.0
    %178 = vmatpush2.msra.mxu0 0.0
    %179 = vmatprep.subr.mxu0 0.0
    %180 = vmatpush2.msra.mxu0 0.0
    %181 = vmatprep.subr.mxu0 0.0
    %182 = vmatpush2.msra.mxu0 0.0
    %183 = vmatprep.subr.mxu0 0.0
    %184 = vmatpush2.msra.mxu0 0.0
    %185 = vmatprep.mubr.f32.mxu0 0.0
    %186 = vmatmul.mubr.f32.gmra.mxu0 %v119
    %v187 = vpop.f32.mrf.mxu0
    %v188 = vadd.f32 %v115, %v187
    %v189 = vpop.f32.mrf.mxu0
    %190 = vdwg.mxu0
    %191 = vst [vmem:[#allocation2] sm:$0xff] %v188
    // Predicated region
    $region22: #{aux_classifier.1} parent=1 // pred_check
      _
    $region23: #{aux_classifier.1} parent=1 // pred_check_branch
      %193 = sbr.rel (0) target = $region25
    $region24: #{aux_classifier.1} parent=1 // pred_region
      %s195 = ssub.s32 128, 128
      %196 = vsyncadd [#allocation3], %s195
      %s198 = sshll.u32 [#allocation2], 4
      %s199 = int_to_ptr.vmem [resolvable:$true] %s198
      %201 = dma.vmem_to_hbm [thread:$0]  %s199, 128, %s5, [#allocation3]
    $region25: #{aux_classifier.1} parent=1 // pred_fallthru
      _
    // Predicated region
    $region26: #{aux_classifier.1} parent=1 // pred_check
      _
    $region27: #{aux_classifier.1} parent=1 // pred_check_branch
      %203 = sbr.rel (0) target = $region29
    $region28: #{aux_classifier.1} parent=1 // pred_region
      %204 = dma.done [#allocation3], 128
    $region29: #{aux_classifier.1} parent=1 // pred_fallthru
      _
    %205 = vsyncpa [#allocation3], 1

</llo_original>
